<compile_context>
chip_gen: v5e
topology: v5e:2x2
jax: 0.10.0
libtpu: 0.0.40
codegen_flags: <defaults>
</compile_context>

<pallas_src>
import math
from functools import partial

import jax
import jax.numpy as jnp
from jax.experimental import pallas as pl
from jax.experimental.pallas import tpu as pltpu


# ------------------------------ tile / VMEM helpers --------------------------------

_MM_TILES = (512, 256, 128)


def _pick_tile(dim, candidates):
    """Largest preferred tile that evenly divides `dim`; fall back to the full dim
    (a full-extent block is always a legal BlockSpec)."""
    for c in candidates:
        if dim % c == 0:
            return c
    return dim


def _tile_and_pad(dim, candidates):
    """Pick a tile for `dim`.  Returns (tile, padded_dim).  Small awkward dims use a
    full-extent block; large awkward dims are padded up to a multiple of the smallest
    candidate so we never build one enormous block."""
    for c in candidates:
        if dim % c == 0:
            return c, dim
    if dim <= candidates[-1]:
        return dim, dim
    base = candidates[-1]
    padded = ((dim + base - 1) // base) * base
    return base, padded


def _vmem_limit(demand_bytes):
    """Scoped-VMEM limit from the actual per-step footprint, ~30% headroom.
    Never below 32 MiB (compiler scratch), never above v7x's 64 MiB physical VMEM."""
    return int(min(max(int(demand_bytes * 1.3), 32 * 2**20), 64 * 2**20))


def _attention_tiles(seq_q, seq_k, d_model, heads, nbytes):
    """Pick (tq, tkv) against a conservative VMEM budget (fits v7x / default scoped)."""
    tq = _pick_tile(seq_q, (256, 128))
    tkv = _pick_tile(seq_k, (512, 256, 128))

    def demand(tq_, tkv_):
        return (2 * tq_ * d_model * nbytes            # Q (double-buffered)
                + 2 * 2 * tkv_ * d_model * nbytes     # K, V (double-buffered)
                + 2 * tq_ * d_model * nbytes          # output (double-buffered)
                + tq_ * d_model * 4                   # f32 accumulator scratch
                + 2 * heads * tq_ * 128 * 4)          # m, l scratch (lane-padded)

    budget = 24 * 2**20
    while (demand(tq, tkv) > budget and tkv % 2 == 0 and (tkv // 2) % 128 == 0
           and seq_k % (tkv // 2) == 0):
        tkv //= 2
    while (demand(tq, tkv) > budget and tq % 2 == 0 and (tq // 2) % 128 == 0
           and seq_q % (tq // 2) == 0):
        tq //= 2
    return tq, tkv, demand(tq, tkv)


# --------------------------- tiled linear projection ---------------------------

def _matmul_kernel(x_ref, w_ref, o_ref, acc_ref):
    @pl.when(pl.program_id(2) == 0)
    def _init():
        acc_ref[...] = jnp.zeros_like(acc_ref)

    acc_ref[...] += jnp.dot(x_ref[...], w_ref[...],
                            preferred_element_type=jnp.float32)

    @pl.when(pl.program_id(2) == pl.num_programs(2) - 1)
    def _finalize():
        o_ref[...] = acc_ref[...].astype(o_ref.dtype)


def linear(x, w):
    """x: (M, K) @ w: (K, N) -> (M, N).  Bias-free, like nn.Linear(bias=False)."""
    M, K = x.shape
    _, N = w.shape
    tm, Mp = _tile_and_pad(M, _MM_TILES)
    tn, Np = _tile_and_pad(N, _MM_TILES)
    tk, Kp = _tile_and_pad(K, _MM_TILES)

    xp = x if (Mp == M and Kp == K) else jnp.pad(x, ((0, Mp - M), (0, Kp - K)))
    wp = w if (Kp == K and Np == N) else jnp.pad(w, ((0, Kp - K), (0, Np - N)))

    nbytes = x.dtype.itemsize
    demand = (2 * tm * tk * nbytes + 2 * tk * tn * nbytes
              + 2 * tm * tn * nbytes + tm * tn * 4)
    cost = pl.CostEstimate(
        flops=2 * Mp * Np * Kp,
        transcendentals=0,
        bytes_accessed=(Mp * Kp + Kp * Np + Mp * Np) * nbytes,
    )

    out = pl.pallas_call(
        _matmul_kernel,
        out_shape=jax.ShapeDtypeStruct((Mp, Np), x.dtype),
        grid_spec=pltpu.PrefetchScalarGridSpec(
            num_scalar_prefetch=0,
            grid=(Mp // tm, Np // tn, Kp // tk),
            in_specs=[
                pl.BlockSpec((tm, tk), lambda i, j, k: (i, k)),
                pl.BlockSpec((tk, tn), lambda i, j, k: (k, j)),
            ],
            out_specs=pl.BlockSpec((tm, tn), lambda i, j, k: (i, j)),
            scratch_shapes=[pltpu.VMEM((tm, tn), jnp.float32)],
        ),
        compiler_params=pltpu.CompilerParams(
            dimension_semantics=("parallel", "parallel", "arbitrary"),
            vmem_limit_bytes=_vmem_limit(demand),
        ),
        cost_estimate=cost,
    )(xp, wp)

    if Mp != M or Np != N:
        out = out[:M, :N]
    return out


# ---------------------- fused K/V projection (k == v input) --------------------

def _kv_matmul_kernel(x_ref, wk_ref, wv_ref, ok_ref, ov_ref, acck_ref, accv_ref):
    @pl.when(pl.program_id(2) == 0)
    def _init():
        acck_ref[...] = jnp.zeros_like(acck_ref)
        accv_ref[...] = jnp.zeros_like(accv_ref)

    x = x_ref[...]
    acck_ref[...] += jnp.dot(x, wk_ref[...], preferred_element_type=jnp.float32)
    accv_ref[...] += jnp.dot(x, wv_ref[...], preferred_element_type=jnp.float32)

    @pl.when(pl.program_id(2) == pl.num_programs(2) - 1)
    def _finalize():
        ok_ref[...] = acck_ref[...].astype(ok_ref.dtype)
        ov_ref[...] = accv_ref[...].astype(ov_ref.dtype)


def linear_kv(x, wk, wv):
    """Fused K and V projections of the same activation: x streamed from HBM once,
    two outputs (no weight concat, no post-slice round trip)."""
    M, K = x.shape
    _, N = wk.shape
    tm, Mp = _tile_and_pad(M, _MM_TILES)
    tn, Np = _tile_and_pad(N, _MM_TILES)
    tk, Kp = _tile_and_pad(K, _MM_TILES)

    xp = x if (Mp == M and Kp == K) else jnp.pad(x, ((0, Mp - M), (0, Kp - K)))
    pad_w = (Kp != K or Np != N)
    wkp = wk if not pad_w else jnp.pad(wk, ((0, Kp - K), (0, Np - N)))
    wvp = wv if not pad_w else jnp.pad(wv, ((0, Kp - K), (0, Np - N)))

    nbytes = x.dtype.itemsize
    demand = (2 * tm * tk * nbytes + 2 * 2 * tk * tn * nbytes
              + 2 * 2 * tm * tn * nbytes + 2 * tm * tn * 4)
    cost = pl.CostEstimate(
        flops=4 * Mp * Np * Kp,
        transcendentals=0,
        bytes_accessed=(Mp * Kp + 2 * Kp * Np + 2 * Mp * Np) * nbytes,
    )

    k_p, v_p = pl.pallas_call(
        _kv_matmul_kernel,
        out_shape=(jax.ShapeDtypeStruct((Mp, Np), x.dtype),
                   jax.ShapeDtypeStruct((Mp, Np), x.dtype)),
        grid_spec=pltpu.PrefetchScalarGridSpec(
            num_scalar_prefetch=0,
            grid=(Mp // tm, Np // tn, Kp // tk),
            in_specs=[
                pl.BlockSpec((tm, tk), lambda i, j, k: (i, k)),
                pl.BlockSpec((tk, tn), lambda i, j, k: (k, j)),
                pl.BlockSpec((tk, tn), lambda i, j, k: (k, j)),
            ],
            out_specs=[
                pl.BlockSpec((tm, tn), lambda i, j, k: (i, j)),
                pl.BlockSpec((tm, tn), lambda i, j, k: (i, j)),
            ],
            scratch_shapes=[pltpu.VMEM((tm, tn), jnp.float32),
                            pltpu.VMEM((tm, tn), jnp.float32)],
        ),
        compiler_params=pltpu.CompilerParams(
            dimension_semantics=("parallel", "parallel", "arbitrary"),
            vmem_limit_bytes=_vmem_limit(demand),
        ),
        cost_estimate=cost,
    )(xp, wkp, wvp)

    if Mp != M or Np != N:
        k_p, v_p = k_p[:M, :N], v_p[:M, :N]
    return k_p, v_p


# --------------------- flash-style scaled dot-product core ---------------------

def _flash_mha_kernel(q_ref, k_ref, v_ref, o_ref, m_sc, l_sc, acc_sc,
                      *, heads, d_k, inv_temperature):
    # Blocks (heads are lane slices of d_model; no transposes anywhere):
    #   q_ref: (tq, d_model)    k_ref, v_ref: (tkv, d_model)    o_ref: (tq, d_model)
    # Scratch (persist across the kv grid axis):
    #   m_sc, l_sc: (heads, tq, 1) f32    acc_sc: (tq, d_model) f32
    ki = pl.program_id(2)

    @pl.when(ki == 0)
    def _init():
        m_sc[...] = jnp.full_like(m_sc, -jnp.inf)
        l_sc[...] = jnp.zeros_like(l_sc)
        acc_sc[...] = jnp.zeros_like(acc_sc)

    q_all = q_ref[...]
    k_all = k_ref[...]
    v_all = v_ref[...]

    # Static unroll over heads (few heads). TODO(synk): fori_loop for heads >= 16.
    for h in range(heads):
        lo = h * d_k
        q = q_all[:, lo:lo + d_k]                 # (tq, d_k)
        k = k_all[:, lo:lo + d_k]                 # (tkv, d_k)
        v = v_all[:, lo:lo + d_k]                 # (tkv, d_k)

        # scores = q @ k^T (contract d_k of both operands, no explicit K transpose),
        # scaled by 1/temperature on the f32 scores.
        s = jax.lax.dot_general(
            q, k, dimension_numbers=(((1,), (1,)), ((), ())),
            preferred_element_type=jnp.float32) * inv_temperature   # (tq, tkv) f32

        # Online softmax update (flash): running max / denom / accumulator in f32.
        m_prev = m_sc[h]                                            # (tq, 1)
        m_new = jnp.maximum(m_prev, jnp.max(s, axis=-1, keepdims=True))
        alpha = jnp.exp(m_prev - m_new)
        p = jnp.exp(s - m_new)
        l_sc[h] = alpha * l_sc[h] + jnp.sum(p, axis=-1, keepdims=True)
        m_sc[h] = m_new

        pv = jnp.dot(p.astype(v.dtype), v,
                     preferred_element_type=jnp.float32)            # (tq, d_k) f32
        acc_sc[:, lo:lo + d_k] = alpha * acc_sc[:, lo:lo + d_k] + pv

    @pl.when(ki == pl.num_programs(2) - 1)
    def _finalize():
        # One dense, lane-wide (tq, d_model) store of the concat-heads slab.
        tq = acc_sc.shape[0]
        inv_l = [jnp.broadcast_to(pl.reciprocal(l_sc[h], approx=False), (tq, d_k))
                 for h in range(heads)]
        scale = jnp.concatenate(inv_l, axis=-1)                     # (tq, d_model)
        o_ref[...] = (acc_sc[...] * scale).astype(o_ref.dtype)


def scaled_dot_product_attention(q_p, k_p, v_p, heads, temperature):
    """q_p: (bs, seq_q, d_model); k_p, v_p: (bs, seq_k, d_model).
    Heads live in lane slices of d_model; returns concat-heads (bs, seq_q, d_model)."""
    bs, seq_q, d_model = q_p.shape
    seq_k = k_p.shape[1]
    d_k = d_model // heads
    nbytes = q_p.dtype.itemsize

    tq, tkv, demand = _attention_tiles(seq_q, seq_k, d_model, heads, nbytes)
    # Parallel axes (bs, seq_q//tq) give the two v7x TensorCores independent work
    # whenever bs * (seq_q // tq) >= 2; the kv axis is the sequential flash loop.
    grid = (bs, seq_q // tq, seq_k // tkv)

    cost = pl.CostEstimate(
        flops=4 * bs * heads * seq_q * seq_k * d_k,
        transcendentals=bs * heads * seq_q * seq_k,
        bytes_accessed=(q_p.size + k_p.size + v_p.size + bs * seq_q * d_model) * nbytes,
    )

    kernel = partial(_flash_mha_kernel, heads=heads, d_k=d_k,
                     inv_temperature=1.0 / temperature)

    return pl.pallas_call(
        kernel,
        out_shape=jax.ShapeDtypeStruct((bs, seq_q, d_model), q_p.dtype),
        grid_spec=pltpu.PrefetchScalarGridSpec(
            num_scalar_prefetch=0,
            grid=grid,
            in_specs=[
                pl.BlockSpec((None, tq, d_model), lambda b, qi, ki: (b, qi, 0)),
                pl.BlockSpec((None, tkv, d_model), lambda b, qi, ki: (b, ki, 0)),
                pl.BlockSpec((None, tkv, d_model), lambda b, qi, ki: (b, ki, 0)),
            ],
            out_specs=pl.BlockSpec((None, tq, d_model), lambda b, qi, ki: (b, qi, 0)),
            scratch_shapes=[
                pltpu.VMEM((heads, tq, 1), jnp.float32),   # running max per head
                pltpu.VMEM((heads, tq, 1), jnp.float32),   # running denom per head
                pltpu.VMEM((tq, d_model), jnp.float32),    # concat-heads accumulator
            ],
        ),
        compiler_params=pltpu.CompilerParams(
            dimension_semantics=("parallel", "parallel", "arbitrary"),
            vmem_limit_bytes=_vmem_limit(demand),
        ),
        cost_estimate=cost,
    )(q_p, k_p, v_p)


# ------------------------------- full forward ----------------------------------

def multi_head_attention(k, v, q, params, heads, *, kv_equal=True):
    """Mirrors MultiHeadAttention.forward with mask=None and eval-mode dropout.

    kv_equal=True (default) follows the module contract "k == v always": the K and V
    projections are computed from `k` with the fused two-output matmul so the
    activation is streamed from HBM once.  Set kv_equal=False to project k and v
    independently."""
    bs, seq_k, d_model = k.shape
    seq_q = q.shape[1]
    d_k = d_model // heads
    temperature = math.sqrt(d_k)

    wq, wk, wv, wo = params["wq"], params["wk"], params["wv"], params["wo"]

    if kv_equal:
        k_p2, v_p2 = linear_kv(k.reshape(bs * seq_k, d_model), wk, wv)
        k_p = k_p2.reshape(bs, seq_k, d_model)
        v_p = v_p2.reshape(bs, seq_k, d_model)
    else:
        k_p = linear(k.reshape(bs * seq_k, d_model), wk).reshape(bs, seq_k, d_model)
        v_p = linear(v.reshape(bs * seq_k, d_model), wv).reshape(bs, seq_k, d_model)
    q_p = linear(q.reshape(bs * seq_q, d_model), wq).reshape(bs, seq_q, d_model)

    # Attention core: heads are lane slices; output comes back already concatenated.
    attn_concat = scaled_dot_product_attention(q_p, k_p, v_p, heads, temperature)

    out = linear(attn_concat.reshape(bs * seq_q, d_model), wo)
    return out.reshape(bs, seq_q, d_model)


# ------------------------------ pure-JAX reference -----------------------------

def reference_mha(k, v, q, params, heads):
    bs, seq_k, d_model = k.shape
    seq_q = q.shape[1]
    d_k = d_model // heads
    temperature = math.sqrt(d_k)
    kp = (k @ params["wk"]).reshape(bs, seq_k, heads, d_k).transpose(0, 2, 1, 3)
    vp = (v @ params["wv"]).reshape(bs, seq_k, heads, d_k).transpose(0, 2, 1, 3)
    qp = (q @ params["wq"]).reshape(bs, seq_q, heads, d_k).transpose(0, 2, 1, 3)
    scores = jnp.einsum("bhqd,bhkd->bhqk", qp, kp) / temperature
    p = jax.nn.softmax(scores, axis=-1)
    attn = jnp.einsum("bhqk,bhkd->bhqd", p, vp)
    attn_concat = attn.transpose(0, 2, 1, 3).reshape(bs, seq_q, d_model)
    return attn_concat @ params["wo"]


# ----------------------------------- main ---------------------------------------

if __name__ == "__main__":
    bs, seq_len, d_model, heads = 2, 8, 32, 4
    dropout_rate = 0.1  # unused at inference (eval mode)

    key = jax.random.PRNGKey(0)
    kx, kw1, kw2, kw3, kw4 = jax.random.split(key, 5)

    # deterministic synthetic parameters (shapes match nn.Linear(d_model, d_model, bias=False))
    scale = 1.0 / math.sqrt(d_model)
    params = {
        "wq": jax.random.uniform(kw1, (d_model, d_model), jnp.float32, -scale, scale),
        "wk": jax.random.uniform(kw2, (d_model, d_model), jnp.float32, -scale, scale),
        "wv": jax.random.uniform(kw3, (d_model, d_model), jnp.float32, -scale, scale),
        "wo": jax.random.uniform(kw4, (d_model, d_model), jnp.float32, -scale, scale),
    }

    kk, kq = jax.random.split(kx, 2)
    # module docstring: k == v always
    k_in = jax.random.normal(kk, (bs, seq_len, d_model), jnp.float32)
    v_in = k_in
    q_in = jax.random.normal(kq, (bs, seq_len, d_model), jnp.float32)

    out = multi_head_attention(k_in, v_in, q_in, params, heads, kv_equal=True)
    out = jax.block_until_ready(out)

    ref = reference_mha(k_in, v_in, q_in, params, heads)
    assert out.shape == (bs, seq_len, d_model)
    assert jnp.allclose(out, ref, atol=1e-3, rtol=1e-3), "mismatch vs reference"

    print("KERNEL_OK")
</pallas_src>

<mosaic_0001>
module attributes {stable_mosaic.version = 11 : i64} {
  func.func @_kv_matmul_kernel(%arg0: i32, %arg1: i32, %arg2: i32, %arg3: memref<16x32xf32, #tpu.memory_space<vmem>>, %arg4: memref<32x32xf32, #tpu.memory_space<vmem>>, %arg5: memref<32x32xf32, #tpu.memory_space<vmem>>, %arg6: memref<16x32xf32, #tpu.memory_space<vmem>>, %arg7: memref<16x32xf32, #tpu.memory_space<vmem>>, %arg8: memref<16x32xf32, #tpu.memory_space<vmem>>, %arg9: memref<16x32xf32, #tpu.memory_space<vmem>>) attributes {dimension_semantics = [#tpu.dimension_semantics<parallel>, #tpu.dimension_semantics<parallel>, #tpu.dimension_semantics<arbitrary>], iteration_bounds = array<i64: 1, 1, 1>, scalar_prefetch = 0 : i64, scratch_operands = 2 : i64, tpu.core_type = #tpu.core_type<tc>, window_params = [{transform_indices = @transform_0, window_bounds = array<i64: 16, 32>}, {transform_indices = @transform_1, window_bounds = array<i64: 32, 32>}, {transform_indices = @transform_2, window_bounds = array<i64: 32, 32>}, {transform_indices = @transform_3, window_bounds = array<i64: 16, 32>}, {transform_indices = @transform_4, window_bounds = array<i64: 16, 32>}]} {
    %c0_i32 = arith.constant 0 : i32
    %0 = arith.cmpi eq, %arg2, %c0_i32 : i32
    %1 = arith.extui %0 : i1 to i32
    %c0_i32_0 = arith.constant 0 : i32
    %2 = arith.cmpi ne, %1, %c0_i32_0 : i32
    scf.if %2 {
      %cst_17 = arith.constant 0.000000e+00 : f32
      %17 = vector.broadcast %cst_17 : f32 to vector<16x32xf32>
      %c0_18 = arith.constant 0 : index
      %c0_19 = arith.constant 0 : index
      %18 = vector.load %arg8[%c0_18, %c0_19] : memref<16x32xf32, #tpu.memory_space<vmem>>, vector<16x32xf32>
      tpu.vector_store %arg8[%c0_18, %c0_19], %17 {strides = array<i32>} : memref<16x32xf32, #tpu.memory_space<vmem>>, vector<16x32xf32>,
      %cst_20 = arith.constant 0.000000e+00 : f32
      %19 = vector.broadcast %cst_20 : f32 to vector<16x32xf32>
      %c0_21 = arith.constant 0 : index
      %c0_22 = arith.constant 0 : index
      %20 = vector.load %arg9[%c0_21, %c0_22] : memref<16x32xf32, #tpu.memory_space<vmem>>, vector<16x32xf32>
      tpu.vector_store %arg9[%c0_21, %c0_22], %19 {strides = array<i32>} : memref<16x32xf32, #tpu.memory_space<vmem>>, vector<16x32xf32>,
    } else {
    }
    %c0 = arith.constant 0 : index
    %c0_1 = arith.constant 0 : index
    %3 = vector.load %arg3[%c0, %c0_1] : memref<16x32xf32, #tpu.memory_space<vmem>>, vector<16x32xf32>
    %c0_2 = arith.constant 0 : index
    %c0_3 = arith.constant 0 : index
    %4 = vector.load %arg8[%c0_2, %c0_3] : memref<16x32xf32, #tpu.memory_space<vmem>>, vector<16x32xf32>
    %c0_4 = arith.constant 0 : index
    %c0_5 = arith.constant 0 : index
    %5 = vector.load %arg4[%c0_4, %c0_5] : memref<32x32xf32, #tpu.memory_space<vmem>>, vector<32x32xf32>
    %cst = arith.constant dense<0.000000e+00> : vector<16x32xf32>
    %6 = tpu.matmul %3, %5, %cst {dimension_numbers = #tpu.dot_dimension_numbers<[1], [0], [0], [1], [0, 0, 1, 1], [], []>} : vector<16x32xf32>, vector<32x32xf32>, vector<16x32xf32> -> vector<16x32xf32>
    %7 = arith.addf %4, %6 : vector<16x32xf32>
    %c0_6 = arith.constant 0 : index
    %c0_7 = arith.constant 0 : index
    %8 = vector.load %arg8[%c0_6, %c0_7] : memref<16x32xf32, #tpu.memory_space<vmem>>, vector<16x32xf32>
    tpu.vector_store %arg8[%c0_6, %c0_7], %7 {strides = array<i32>} : memref<16x32xf32, #tpu.memory_space<vmem>>, vector<16x32xf32>,
    %c0_8 = arith.constant 0 : index
    %c0_9 = arith.constant 0 : index
    %9 = vector.load %arg9[%c0_8, %c0_9] : memref<16x32xf32, #tpu.memory_space<vmem>>, vector<16x32xf32>
    %c0_10 = arith.constant 0 : index
    %c0_11 = arith.constant 0 : index
    %10 = vector.load %arg5[%c0_10, %c0_11] : memref<32x32xf32, #tpu.memory_space<vmem>>, vector<32x32xf32>
    %cst_12 = arith.constant dense<0.000000e+00> : vector<16x32xf32>
    %11 = tpu.matmul %3, %10, %cst_12 {dimension_numbers = #tpu.dot_dimension_numbers<[1], [0], [0], [1], [0, 0, 1, 1], [], []>} : vector<16x32xf32>, vector<32x32xf32>, vector<16x32xf32> -> vector<16x32xf32>
    %12 = arith.addf %9, %11 : vector<16x32xf32>
    %c0_13 = arith.constant 0 : index
    %c0_14 = arith.constant 0 : index
    %13 = vector.load %arg9[%c0_13, %c0_14] : memref<16x32xf32, #tpu.memory_space<vmem>>, vector<16x32xf32>
    tpu.vector_store %arg9[%c0_13, %c0_14], %12 {strides = array<i32>} : memref<16x32xf32, #tpu.memory_space<vmem>>, vector<16x32xf32>,
    %c0_i32_15 = arith.constant 0 : i32
    %14 = arith.cmpi eq, %arg2, %c0_i32_15 : i32
    %15 = arith.extui %14 : i1 to i32
    %c0_i32_16 = arith.constant 0 : i32
    %16 = arith.cmpi ne, %15, %c0_i32_16 : i32
    scf.if %16 {
      %c0_17 = arith.constant 0 : index
      %c0_18 = arith.constant 0 : index
      %17 = vector.load %arg8[%c0_17, %c0_18] : memref<16x32xf32, #tpu.memory_space<vmem>>, vector<16x32xf32>
      %c0_19 = arith.constant 0 : index
      %c0_20 = arith.constant 0 : index
      %18 = vector.load %arg6[%c0_19, %c0_20] : memref<16x32xf32, #tpu.memory_space<vmem>>, vector<16x32xf32>
      tpu.vector_store %arg6[%c0_19, %c0_20], %17 {strides = array<i32>} : memref<16x32xf32, #tpu.memory_space<vmem>>, vector<16x32xf32>,
      %c0_21 = arith.constant 0 : index
      %c0_22 = arith.constant 0 : index
      %19 = vector.load %arg9[%c0_21, %c0_22] : memref<16x32xf32, #tpu.memory_space<vmem>>, vector<16x32xf32>
      %c0_23 = arith.constant 0 : index
      %c0_24 = arith.constant 0 : index
      %20 = vector.load %arg7[%c0_23, %c0_24] : memref<16x32xf32, #tpu.memory_space<vmem>>, vector<16x32xf32>
      tpu.vector_store %arg7[%c0_23, %c0_24], %19 {strides = array<i32>} : memref<16x32xf32, #tpu.memory_space<vmem>>, vector<16x32xf32>,
    } else {
    }
    return
  }
  func.func @transform_0(%arg0: i32, %arg1: i32, %arg2: i32) -> (i32, i32) {
    %c0_i32 = arith.constant 0 : i32
    return %arg0, %arg2 : i32, i32
  }
  func.func @transform_1(%arg0: i32, %arg1: i32, %arg2: i32) -> (i32, i32) {
    %c0_i32 = arith.constant 0 : i32
    return %arg2, %arg1 : i32, i32
  }
  func.func @transform_2(%arg0: i32, %arg1: i32, %arg2: i32) -> (i32, i32) {
    %c0_i32 = arith.constant 0 : i32
    return %arg2, %arg1 : i32, i32
  }
  func.func @transform_3(%arg0: i32, %arg1: i32, %arg2: i32) -> (i32, i32) {
    %c0_i32 = arith.constant 0 : i32
    return %arg0, %arg1 : i32, i32
  }
  func.func @transform_4(%arg0: i32, %arg1: i32, %arg2: i32) -> (i32, i32) {
    %c0_i32 = arith.constant 0 : i32
    return %arg0, %arg1 : i32, i32
  }
}

</mosaic_0001>

<llo_original>
// kernel: tpu_custom_call.1
$region0: #{tpu_custom_call.1}
  #allocation0 [shape = 'u32[]', space=smem, size = 0x4, offset = 0x4, fixed_abs, tag = 'smem constant byte address 0x4 - core index']
  #allocation1 [shape = 'u32[72,128]{1,0:T(1,128)}', space=vmem, size = 0x9000, scoped, tag = 'internal scratch']
  #allocation2 [shape = 'f32[16,32]{1,0:T(8,128)}', space=vmem, size = 0x2000, scoped, tag = 'scratch operand']
  #allocation3 [shape = 'f32[16,32]{1,0:T(8,128)}', space=vmem, size = 0x2000, scoped, tag = 'scratch operand']
  %s0 = inlined_call_operand.hbm [shape: f32[16,32], index: 0, kind: input, shape index: {}]
  %s1 = inlined_call_operand.hbm [shape: f32[32,32], index: 1, kind: input, shape index: {}]
  %s2 = inlined_call_operand.hbm [shape: f32[32,32], index: 2, kind: input, shape index: {}]
  %s3 = inlined_call_operand.hbm [shape: f32[16,32], index: 3, kind: output, shape index: {0}]
  %s4 = inlined_call_operand.hbm [shape: f32[16,32], index: 4, kind: output, shape index: {1}]
  %5 = xla_tuple %s3, %s4
  %s6 = sld [smem:[#allocation0]]
  $region50: #{tpu_custom_call.1} parent=0
    _
  %s8 = ssub.s32 1, %s6
  %s9 = scalar_select 0, %s8, %s6
  $region1: #{tpu_custom_call.1} parent=0
    #allocation4 [shape = 'u8[8192]{0}', space=vmem, size = 0x2000, scoped, tag = 'input window, operand 0, single buffered']
    #allocation5 [shape = 's32[1]{0}', space=sflag, size = 0x4, scoped, tag = 'scoped memory for tpu_custom_call.1']
    #allocation6 [shape = 's32[1]{0}', space=sflag, size = 0x4, scoped, tag = 'scoped memory for tpu_custom_call.1']
    #allocation7 [shape = 'u8[16384]{0}', space=vmem, size = 0x4000, scoped, tag = 'input window, operand 1, single buffered']
    #allocation8 [shape = 's32[1]{0}', space=sflag, size = 0x4, scoped, tag = 'scoped memory for tpu_custom_call.1']
    #allocation9 [shape = 'u8[16384]{0}', space=vmem, size = 0x4000, scoped, tag = 'input window, operand 2, single buffered']
    #allocation10 [shape = 'u8[8192]{0}', space=vmem, size = 0x2000, scoped, tag = 'output window, operand 0, single buffered']
    #allocation11 [shape = 'u8[8192]{0}', space=vmem, size = 0x2000, scoped, tag = 'output window, operand 1, single buffered']
    #allocation12 [shape = 's32[1]{0}', space=sflag, size = 0x4, scoped, tag = 'scoped memory for tpu_custom_call.1']
    %10 = vsyncpa [#allocation5], 0
    %11 = vsyncpa [#allocation8], 0
    %12 = vsyncpa [#allocation6], 0
    %13 = vsyncpa [#allocation12], 0
    // Predicated region
    $region2: #{tpu_custom_call.1} parent=1 // pred_check
      _
    $region3: #{tpu_custom_call.1} parent=1 // pred_check_branch
      %15 = sbr.rel (0) target = $region5
    $region4: #{tpu_custom_call.1} parent=1 // pred_region
      %17 = vsyncadd [#allocation5], 0
      %s18 = sshll.u32 %s0, 4
      %s19 = int_to_ptr.hbm [resolvable:$true] %s18
      %s20 = sshll.u32 [#allocation4], 4
      %s21 = int_to_ptr.vmem [resolvable:$true] %s20
      %26 = dma.hbm_to_vmem [thread:$0]  %s19, 256, %s21, [#allocation5], 128, 128, 8
    $region5: #{tpu_custom_call.1} parent=1 // pred_fallthru
      _
    // Predicated region
    $region6: #{tpu_custom_call.1} parent=1 // pred_check
      _
    $region7: #{tpu_custom_call.1} parent=1 // pred_check_branch
      %28 = sbr.rel (0) target = $region9
    $region8: #{tpu_custom_call.1} parent=1 // pred_region
      %30 = vsyncadd [#allocation8], 0
      %s31 = sshll.u32 %s1, 4
      %s32 = int_to_ptr.hbm [resolvable:$true] %s31
      %s33 = sshll.u32 [#allocation7], 4
      %s34 = int_to_ptr.vmem [resolvable:$true] %s33
      %39 = dma.hbm_to_vmem [thread:$0]  %s32, 512, %s34, [#allocation8], 128, 128, 8
    $region9: #{tpu_custom_call.1} parent=1 // pred_fallthru
      _
    // Predicated region
    $region10: #{tpu_custom_call.1} parent=1 // pred_check
      _
    $region11: #{tpu_custom_call.1} parent=1 // pred_check_branch
      %41 = sbr.rel (0) target = $region13
    $region12: #{tpu_custom_call.1} parent=1 // pred_region
      %43 = vsyncadd [#allocation8], 0
      %s44 = sshll.u32 %s2, 4
      %s45 = int_to_ptr.hbm [resolvable:$true] %s44
      %s46 = sshll.u32 [#allocation9], 4
      %s47 = int_to_ptr.vmem [resolvable:$true] %s46
      %52 = dma.hbm_to_vmem [thread:$0]  %s45, 512, %s47, [#allocation8], 128, 128, 8
    $region13: #{tpu_custom_call.1} parent=1 // pred_fallthru
      _
    // Predicated region
    $region14: #{tpu_custom_call.1} parent=1 // pred_check
      _
    $region15: #{tpu_custom_call.1} parent=1 // pred_check_branch
      %54 = sbr.rel (0) target = $region17
    $region16: #{tpu_custom_call.1} parent=1 // pred_region
      %56 = dma.done [#allocation5], 256
    $region17: #{tpu_custom_call.1} parent=1 // pred_fallthru
      _
    // Predicated region
    $region18: #{tpu_custom_call.1} parent=1 // pred_check
      _
    $region19: #{tpu_custom_call.1} parent=1 // pred_check_branch
      %58 = sbr.rel (0) target = $region21
    $region20: #{tpu_custom_call.1} parent=1 // pred_region
      %60 = dma.done [#allocation8], 512
    $region21: #{tpu_custom_call.1} parent=1 // pred_fallthru
      _
    // Predicated region
    $region22: #{tpu_custom_call.1} parent=1 // pred_check
      _
    $region23: #{tpu_custom_call.1} parent=1 // pred_check_branch
      %62 = sbr.rel (0) target = $region25
    $region24: #{tpu_custom_call.1} parent=1 // pred_region
      %64 = dma.done [#allocation8], 512
    $region25: #{tpu_custom_call.1} parent=1 // pred_fallthru
      _
    %p65 = scmp.eq.s32.totalorder 0, 0
    // Predicated region
    $region26: #{tpu_custom_call.1} parent=1 // pred_check
      %p66 = pneg %p65
    $region27: #{tpu_custom_call.1} parent=1 // pred_check_branch
      %68 = sbr.rel (%p66) target = $region29
    $region28: #{tpu_custom_call.1} parent=1 // pred_region
      %vm69 = vcmask 261120
      %70 = vst.msk [vmem:[#allocation2] sm:$0xff] %vm69, 0.0
      %71 = vst.msk [vmem:[#allocation2 + $0x8] sm:$0xff] %vm69, 0.0
      %72 = vst.msk [vmem:[#allocation3] sm:$0xff] %vm69, 0.0
      %73 = vst.msk [vmem:[#allocation3 + $0x8] sm:$0xff] %vm69, 0.0
    $region29: #{tpu_custom_call.1} parent=1 // pred_fallthru
      _
    %v74 = vld [vmem:[#allocation4] sm:$0xff]
    %v75 = vld [vmem:[#allocation4 + $0x8] sm:$0xff]
    %v76 = vld [vmem:[#allocation2] sm:$0xff]
    %v77 = vld [vmem:[#allocation2 + $0x8] sm:$0xff]
    %v78 = vld [vmem:[#allocation7] sm:$0xff]
    %v79 = vld [vmem:[#allocation7 + $0x8] sm:$0xff]
    %v80 = vld [vmem:[#allocation7 + $0x10] sm:$0xff]
    %v81 = vld [vmem:[#allocation7 + $0x18] sm:$0xff]
    %vm82 = vcmask 261120
    %v84 = vsel %vm82, %v74, 0
    %v87 = vsel %vm82, %v75, 0
    %89 = vmatpush.msra.mxu0 0.0
    %90 = vmatpush.msra.mxu0 0.0
    %91 = vmatpush.msra.mxu0 0.0
    %92 = vmatpush.msra.mxu0 0.0
    %93 = vmatpush.msra.mxu0 0.0
    %94 = vmatpush.msra.mxu0 0.0
    %95 = vmatpush.msra.mxu0 0.0
    %96 = vmatpush.msra.mxu0 0.0
    %97 = vmatpush.msra.mxu0 0.0
    %98 = vmatpush.msra.mxu0 0.0
    %99 = vmatpush.msra.mxu0 0.0
    %100 = vmatpush.msra.mxu0 0.0
    %101 = vmatpush.msra.mxu0 %v81
    %102 = vmatpush.msra.mxu0 %v80
    %103 = vmatpush.msra.mxu0 %v79
    %104 = vmatpush.msra.mxu0 %v78
    %105 = vmatmul.f32.gmra.mxu0 %v84
    %v106 = vpop.f32.mrf.mxu0
    %v107 = vadd.f32 0.0, %v106
    %108 = vmatmul.f32.gmra.mxu0 %v87
    %v109 = vpop.f32.mrf.mxu0
    %v110 = vadd.f32 0.0, %v109
    %111 = vdwg.mxu0
    %v112 = vadd.f32 %v76, %v107
    %v113 = vadd.f32 %v77, %v110
    %114 = vst.msk [vmem:[#allocation2] sm:$0xff] %vm82, %v112
    %115 = vst.msk [vmem:[#allocation2 + $0x8] sm:$0xff] %vm82, %v113
    %v116 = vld [vmem:[#allocation3] sm:$0xff]
    %v117 = vld [vmem:[#allocation3 + $0x8] sm:$0xff]
    %v118 = vld [vmem:[#allocation9] sm:$0xff]
    %v119 = vld [vmem:[#allocation9 + $0x8] sm:$0xff]
    %v120 = vld [vmem:[#allocation9 + $0x10] sm:$0xff]
    %v121 = vld [vmem:[#allocation9 + $0x18] sm:$0xff]
    %122 = vmatpush.msra.mxu0 0.0
    %123 = vmatpush.msra.mxu0 0.0
    %124 = vmatpush.msra.mxu0 0.0
    %125 = vmatpush.msra.mxu0 0.0
    %126 = vmatpush.msra.mxu0 0.0
    %127 = vmatpush.msra.mxu0 0.0
    %128 = vmatpush.msra.mxu0 0.0
    %129 = vmatpush.msra.mxu0 0.0
    %130 = vmatpush.msra.mxu0 0.0
    %131 = vmatpush.msra.mxu0 0.0
    %132 = vmatpush.msra.mxu0 0.0
    %133 = vmatpush.msra.mxu0 0.0
    %134 = vmatpush.msra.mxu0 %v121
    %135 = vmatpush.msra.mxu0 %v120
    %136 = vmatpush.msra.mxu0 %v119
    %137 = vmatpush.msra.mxu0 %v118
    %138 = vmatmul.f32.gmra.mxu0 %v84
    %v139 = vpop.f32.mrf.mxu0
    %v140 = vadd.f32 0.0, %v139
    %141 = vmatmul.f32.gmra.mxu0 %v87
    %v142 = vpop.f32.mrf.mxu0
    %v143 = vadd.f32 0.0, %v142
    %144 = vdwg.mxu0
    %v145 = vadd.f32 %v116, %v140
    %v146 = vadd.f32 %v117, %v143
    %147 = vst.msk [vmem:[#allocation3] sm:$0xff] %vm82, %v145
    %148 = vst.msk [vmem:[#allocation3 + $0x8] sm:$0xff] %vm82, %v146
    // Predicated region
    $region30: #{tpu_custom_call.1} parent=1 // pred_check
      %p149 = pneg %p65
    $region31: #{tpu_custom_call.1} parent=1 // pred_check_branch
      %151 = sbr.rel (%p149) target = $region33
    $region32: #{tpu_custom_call.1} parent=1 // pred_region
      %v152 = vld [vmem:[#allocation2] sm:$0xff]
      %v153 = vld [vmem:[#allocation2 + $0x8] sm:$0xff]
      %154 = vst.msk [vmem:[#allocation10] sm:$0xff] %vm82, %v152
      %155 = vst.msk [vmem:[#allocation10 + $0x8] sm:$0xff] %vm82, %v153
      %v156 = vld [vmem:[#allocation3] sm:$0xff]
      %v157 = vld [vmem:[#allocation3 + $0x8] sm:$0xff]
      %158 = vst.msk [vmem:[#allocation11] sm:$0xff] %vm82, %v156
      %159 = vst.msk [vmem:[#allocation11 + $0x8] sm:$0xff] %vm82, %v157
    $region33: #{tpu_custom_call.1} parent=1 // pred_fallthru
      _
    // Predicated region
    $region34: #{tpu_custom_call.1} parent=1 // pred_check
      _
    $region35: #{tpu_custom_call.1} parent=1 // pred_check_branch
      %161 = sbr.rel (0) target = $region37
    $region36: #{tpu_custom_call.1} parent=1 // pred_region
      %163 = vsyncadd [#allocation6], 0
      %s164 = sshll.u32 [#allocation10], 4
      %s165 = int_to_ptr.vmem [resolvable:$true] %s164
      %s166 = sshll.u32 %s3, 4
      %s167 = int_to_ptr.hbm [resolvable:$true] %s166
      %172 = dma.vmem_to_hbm [thread:$0]  %s165, 256, %s167, [#allocation6], 128, 128, 8
    $region37: #{tpu_custom_call.1} parent=1 // pred_fallthru
      _
    // Predicated region
    $region38: #{tpu_custom_call.1} parent=1 // pred_check
      _
    $region39: #{tpu_custom_call.1} parent=1 // pred_check_branch
      %174 = sbr.rel (0) target = $region41
    $region40: #{tpu_custom_call.1} parent=1 // pred_region
      %176 = vsyncadd [#allocation12], 0
      %s177 = sshll.u32 [#allocation11], 4
      %s178 = int_to_ptr.vmem [resolvable:$true] %s177
      %s179 = sshll.u32 %s4, 4
      %s180 = int_to_ptr.hbm [resolvable:$true] %s179
      %185 = dma.vmem_to_hbm [thread:$0]  %s178, 256, %s180, [#allocation12], 128, 128, 8
    $region41: #{tpu_custom_call.1} parent=1 // pred_fallthru
      _
    // Predicated region
    $region42: #{tpu_custom_call.1} parent=1 // pred_check
      _
    $region43: #{tpu_custom_call.1} parent=1 // pred_check_branch
      %187 = sbr.rel (0) target = $region45
    $region44: #{tpu_custom_call.1} parent=1 // pred_region
      %189 = dma.done [#allocation6], 256
    $region45: #{tpu_custom_call.1} parent=1 // pred_fallthru
      _
    // Predicated region
    $region46: #{tpu_custom_call.1} parent=1 // pred_check
      _
    $region47: #{tpu_custom_call.1} parent=1 // pred_check_branch
      %191 = sbr.rel (0) target = $region49
    $region48: #{tpu_custom_call.1} parent=1 // pred_region
      %193 = dma.done [#allocation12], 256
    $region49: #{tpu_custom_call.1} parent=1 // pred_fallthru
      _
    %194 = vsyncpa [#allocation5], 1
    %195 = vsyncpa [#allocation8], 1
    %196 = vsyncpa [#allocation6], 1
    %197 = vsyncpa [#allocation12], 1

</llo_original>
